<compile_context>
chip_gen: v6e
topology: v6e:2x2x1
jax: 0.10.0
libtpu: 0.0.40
codegen_flags: <defaults>
</compile_context>

<pallas_src>
import functools

import jax
import jax.numpy as jnp
from jax.experimental import pallas as pl
from jax.experimental.pallas import tpu as pltpu

N_BINS = 5
_BIN_LO = 0.5
_BIN_HI = 1.0
_BIN_W = (_BIN_HI - _BIN_LO) / N_BINS  # 0.1 (torch.linspace(0.5, 1, n_bins+1) spacing)


def _round_up(x, m):
    return (x + m - 1) // m * m


def _ece_kernel(logits_ref, labels_ref, ece_ref,
                cnt_ref, accs_ref, confs_ref, *, n_valid, n_pad):
    pid = pl.program_id(0)

    @pl.when(pid == 0)
    def _init():
        cnt_ref[...] = jnp.zeros_like(cnt_ref)
        accs_ref[...] = jnp.zeros_like(accs_ref)
        confs_ref[...] = jnp.zeros_like(confs_ref)

    logits = logits_ref[...].astype(jnp.float32)          # (C, TILE_N)
    labels = labels_ref[...]                              # (1, TILE_N) int32
    c, tn = logits.shape

    # max softmax prob: softmax = exp(x - m) / sum(exp(x - m)); the max entry's
    # numerator is exp(0) == 1, so conf = 1 / sum(exp(x - m)).  No max-over-e.
    m = jnp.max(logits, axis=0, keepdims=True)                       # (1, TILE_N)
    s = jnp.sum(jnp.exp(logits - m), axis=0, keepdims=True)          # (1, TILE_N)
    conf = pl.reciprocal(s, approx=False)                            # (1, TILE_N)

    # prediction = first class index attaining the max (torch.max tie-break)
    row = jax.lax.broadcasted_iota(jnp.int32, (c, tn), 0)
    pred = jnp.min(jnp.where(logits == m, row, c), axis=0, keepdims=True)
    acc = (pred == labels).astype(jnp.float32)                       # (1, TILE_N)

    # vectorised binning: (N_BINS, TILE_N) membership mask, boundaries built
    # from an iota (same f32 arithmetic as the reference).
    bw = jnp.float32(_BIN_W)
    bidx = jax.lax.broadcasted_iota(jnp.int32, (N_BINS, 1), 0).astype(jnp.float32)
    lowers = jnp.float32(_BIN_LO) + bidx * bw                        # (N_BINS, 1)
    uppers = lowers + bw
    mask = jnp.logical_and(conf > lowers, conf <= uppers).astype(jnp.float32)

    if n_pad != n_valid:  # static branch: mask out padded tail samples
        col = jax.lax.broadcasted_iota(jnp.int32, (1, tn), 1) + pid * tn
        mask = mask * (col < n_valid).astype(jnp.float32)

    # 3 lane reductions total (instead of 15 full passes for 5 bins)
    cnt_ref[...] += jnp.sum(mask, axis=1, keepdims=True)             # (N_BINS, 1)
    accs_ref[...] += jnp.sum(mask * acc, axis=1, keepdims=True)
    confs_ref[...] += jnp.sum(mask * conf, axis=1, keepdims=True)

    @pl.when(pid == pl.num_programs(0) - 1)
    def _finalize():
        cnt = cnt_ref[...]
        gap = jnp.abs(confs_ref[...] - accs_ref[...])
        # prop_in_bin * |avg_conf - avg_acc| == |sum_conf - sum_acc| / N
        ece = jnp.sum(jnp.where(cnt > 0, gap, 0.0), axis=(0, 1), keepdims=True)
        ece_ref[...] = ece * jnp.float32(1.0 / n_valid)


def ece_loss(logits, labels, *, tile_n=1024):
    """Pallas ECE.  logits: (N, C) float (f32 or bf16), labels: (N,) int -> (1,)."""
    n, c = logits.shape
    tile_n = _round_up(min(tile_n, _round_up(n, 128)), 128)
    n_pad = _round_up(n, tile_n)

    logits_t = logits.T                                  # (C, N): samples on lanes
    labels_i = labels.astype(jnp.int32)
    if n_pad != n:
        logits_t = jnp.pad(logits_t, ((0, 0), (0, n_pad - n)))
        labels_i = jnp.pad(labels_i, (0, n_pad - n), constant_values=-1)
    labels2d = labels_i.reshape(1, n_pad)

    kernel = functools.partial(_ece_kernel, n_valid=n, n_pad=n_pad)
    out = pl.pallas_call(
        kernel,
        out_shape=jax.ShapeDtypeStruct((1, 1), jnp.float32),
        grid=(n_pad // tile_n,),
        in_specs=[
            pl.BlockSpec((c, tile_n), lambda i: (0, i)),   # logits^T tile
            pl.BlockSpec((1, tile_n), lambda i: (0, i)),   # labels tile
        ],
        out_specs=pl.BlockSpec((1, 1), lambda i: (0, 0)),  # resident accumulator
        scratch_shapes=[
            pltpu.VMEM((N_BINS, 1), jnp.float32),          # per-bin counts
            pltpu.VMEM((N_BINS, 1), jnp.float32),          # per-bin sum(accuracy)
            pltpu.VMEM((N_BINS, 1), jnp.float32),          # per-bin sum(confidence)
        ],
        compiler_params=pltpu.CompilerParams(
            dimension_semantics=("arbitrary",),            # N axis carries accumulators
            vmem_limit_bytes=32 * 1024 * 1024,
        ),
    )(logits_t, labels2d)
    return out.reshape(1)  # matches torch.zeros(1)-shaped ece


def _reference_ece(logits, labels):
    """Plain-JAX reference mirroring the PyTorch module."""
    sm = jax.nn.softmax(logits.astype(jnp.float32), axis=1)
    conf = jnp.max(sm, axis=1)
    pred = jnp.argmax(sm, axis=1)
    acc = (pred == labels).astype(jnp.float32)
    bw = jnp.float32(_BIN_W)
    lowers = jnp.float32(_BIN_LO) + jnp.arange(N_BINS, dtype=jnp.float32) * bw
    uppers = lowers + bw
    n = logits.shape[0]
    ece = jnp.float32(0.0)
    for b in range(N_BINS):
        in_bin = (conf > lowers[b]) & (conf <= uppers[b])
        cnt = jnp.sum(in_bin.astype(jnp.float32))
        safe = jnp.maximum(cnt, 1.0)
        acc_in = jnp.sum(acc * in_bin) / safe
        conf_in = jnp.sum(conf * in_bin) / safe
        ece = ece + jnp.where(cnt > 0, jnp.abs(conf_in - acc_in) * (cnt / n), 0.0)
    return ece


if __name__ == "__main__":
    key = jax.random.PRNGKey(0)
    # (N multiple of tile) and (N requiring padding + valid-mask) cases,
    # both exercising multi-step grid accumulation with tile_n=128.
    for (n, c, tile) in [(384, 10, 128), (300, 10, 128)]:
        k1, k2, key = jax.random.split(key, 3)
        logits = jax.random.normal(k1, (n, c), jnp.float32) * 2.0
        labels = jax.random.randint(k2, (n,), 0, c, jnp.int32)

        out = ece_loss(logits, labels, tile_n=tile)
        jax.block_until_ready(out)

        ref = _reference_ece(logits, labels)
        assert out.shape == (1,)
        assert jnp.allclose(out[0], ref, atol=1e-5), (n, c, tile, out, ref)
    print("KERNEL_OK")
</pallas_src>

<mosaic_0001>
module attributes {stable_mosaic.version = 11 : i64} {
  func.func @_ece_kernel(%arg0: i32, %arg1: memref<10x128xf32, #tpu.memory_space<vmem>>, %arg2: memref<1x128xi32, #tpu.memory_space<vmem>>, %arg3: memref<1x1xf32, #tpu.memory_space<vmem>>, %arg4: memref<5x1xf32, #tpu.memory_space<vmem>>, %arg5: memref<5x1xf32, #tpu.memory_space<vmem>>, %arg6: memref<5x1xf32, #tpu.memory_space<vmem>>) attributes {dimension_semantics = [#tpu.dimension_semantics<arbitrary>], iteration_bounds = array<i64: 3>, scalar_prefetch = 0 : i64, scratch_operands = 3 : i64, tpu.core_type = #tpu.core_type<tc>, window_params = [{transform_indices = @transform_0, window_bounds = array<i64: 10, 128>}, {transform_indices = @transform_1, window_bounds = array<i64: 1, 128>}, {pipeline_mode = #tpu.pipeline_mode<synchronous>, transform_indices = @transform_2, window_bounds = array<i64: 1, 1>}]} {
    %c0_i32 = arith.constant 0 : i32
    %0 = arith.cmpi eq, %arg0, %c0_i32 : i32
    %1 = arith.extui %0 : i1 to i32
    %c0_i32_0 = arith.constant 0 : i32
    %2 = arith.cmpi ne, %1, %c0_i32_0 : i32
    scf.if %2 {
      %cst_25 = arith.constant 0.000000e+00 : f32
      %62 = vector.broadcast %cst_25 : f32 to vector<5x1xf32>
      %c0_26 = arith.constant 0 : index
      %c0_27 = arith.constant 0 : index
      %63 = vector.load %arg4[%c0_26, %c0_27] : memref<5x1xf32, #tpu.memory_space<vmem>>, vector<5x1xf32>
      tpu.vector_store %arg4[%c0_26, %c0_27], %62 {strides = array<i32>} : memref<5x1xf32, #tpu.memory_space<vmem>>, vector<5x1xf32>,
      %cst_28 = arith.constant 0.000000e+00 : f32
      %64 = vector.broadcast %cst_28 : f32 to vector<5x1xf32>
      %c0_29 = arith.constant 0 : index
      %c0_30 = arith.constant 0 : index
      %65 = vector.load %arg5[%c0_29, %c0_30] : memref<5x1xf32, #tpu.memory_space<vmem>>, vector<5x1xf32>
      tpu.vector_store %arg5[%c0_29, %c0_30], %64 {strides = array<i32>} : memref<5x1xf32, #tpu.memory_space<vmem>>, vector<5x1xf32>,
      %cst_31 = arith.constant 0.000000e+00 : f32
      %66 = vector.broadcast %cst_31 : f32 to vector<5x1xf32>
      %c0_32 = arith.constant 0 : index
      %c0_33 = arith.constant 0 : index
      %67 = vector.load %arg6[%c0_32, %c0_33] : memref<5x1xf32, #tpu.memory_space<vmem>>, vector<5x1xf32>
      tpu.vector_store %arg6[%c0_32, %c0_33], %66 {strides = array<i32>} : memref<5x1xf32, #tpu.memory_space<vmem>>, vector<5x1xf32>,
    } else {
    }
    %c0 = arith.constant 0 : index
    %c0_1 = arith.constant 0 : index
    %3 = vector.load %arg1[%c0, %c0_1] : memref<10x128xf32, #tpu.memory_space<vmem>>, vector<10x128xf32>
    %c0_2 = arith.constant 0 : index
    %c0_3 = arith.constant 0 : index
    %4 = vector.load %arg2[%c0_2, %c0_3] : memref<1x128xi32, #tpu.memory_space<vmem>>, vector<1x128xi32>
    %cst = arith.constant dense<0xFF800000> : vector<128xf32>
    %5 = vector.multi_reduction <maximumf>, %3, %cst [0] : vector<10x128xf32> to vector<128xf32>
    %6 = vector.shape_cast %5 : vector<128xf32> to vector<1x128xf32>
    %7 = vector.broadcast %6 : vector<1x128xf32> to vector<10x128xf32>
    %8 = arith.subf %3, %7 : vector<10x128xf32>
    %9 = math.exp %8 : vector<10x128xf32>
    %cst_4 = arith.constant dense<0.000000e+00> : vector<128xf32>
    %10 = vector.multi_reduction <add>, %9, %cst_4 [0] : vector<10x128xf32> to vector<128xf32>
    %11 = vector.shape_cast %10 : vector<128xf32> to vector<1x128xf32>
    %12 = tpu.reciprocal %11 : vector<1x128xf32> -> vector<1x128xf32>
    %13 = tpu.iota {dimensions = array<i32: 0>} : vector<10x128xi32>
    %14 = vector.broadcast %6 : vector<1x128xf32> to vector<10x128xf32>
    %15 = arith.cmpf oeq, %3, %14 : vector<10x128xf32>
    %c10_i32 = arith.constant 10 : i32
    %16 = vector.broadcast %c10_i32 : i32 to vector<10x128xi32>
    %17 = arith.select %15, %13, %16 : vector<10x128xi1>, vector<10x128xi32>
    %cst_5 = arith.constant dense<2147483647> : vector<128xi32>
    %18 = vector.multi_reduction <minsi>, %17, %cst_5 [0] : vector<10x128xi32> to vector<128xi32>
    %19 = vector.shape_cast %18 : vector<128xi32> to vector<1x128xi32>
    %20 = arith.cmpi eq, %19, %4 : vector<1x128xi32>
    %21 = arith.extui %20 : vector<1x128xi1> to vector<1x128xi32>
    %22 = arith.sitofp %21 : vector<1x128xi32> to vector<1x128xf32>
    %23 = tpu.iota {dimensions = array<i32: 0>} : vector<5x1xi32>
    %24 = arith.sitofp %23 : vector<5x1xi32> to vector<5x1xf32>
    %cst_6 = arith.constant 1.000000e-01 : f32
    %25 = vector.broadcast %cst_6 : f32 to vector<5x1xf32>
    %26 = arith.mulf %24, %25 : vector<5x1xf32>
    %cst_7 = arith.constant 5.000000e-01 : f32
    %27 = vector.broadcast %cst_7 : f32 to vector<5x1xf32>
    %28 = arith.addf %27, %26 : vector<5x1xf32>
    %cst_8 = arith.constant 1.000000e-01 : f32
    %29 = vector.broadcast %cst_8 : f32 to vector<5x1xf32>
    %30 = arith.addf %28, %29 : vector<5x1xf32>
    %31 = vector.broadcast %12 : vector<1x128xf32> to vector<5x128xf32>
    %32 = vector.broadcast %28 : vector<5x1xf32> to vector<5x128xf32>
    %33 = arith.cmpf ogt, %31, %32 : vector<5x128xf32>
    %34 = vector.broadcast %12 : vector<1x128xf32> to vector<5x128xf32>
    %35 = vector.broadcast %30 : vector<5x1xf32> to vector<5x128xf32>
    %36 = arith.cmpf ole, %34, %35 : vector<5x128xf32>
    %37 = arith.andi %33, %36 : vector<5x128xi1>
    %38 = arith.extui %37 : vector<5x128xi1> to vector<5x128xi32>
    %39 = arith.sitofp %38 : vector<5x128xi32> to vector<5x128xf32>
    %c0_9 = arith.constant 0 : index
    %c0_10 = arith.constant 0 : index
    %40 = vector.load %arg4[%c0_9, %c0_10] : memref<5x1xf32, #tpu.memory_space<vmem>>, vector<5x1xf32>
    %cst_11 = arith.constant dense<0.000000e+00> : vector<5xf32>
    %41 = vector.multi_reduction <add>, %39, %cst_11 [1] : vector<5x128xf32> to vector<5xf32>
    %42 = vector.shape_cast %41 : vector<5xf32> to vector<5x1xf32>
    %43 = arith.addf %40, %42 : vector<5x1xf32>
    %c0_12 = arith.constant 0 : index
    %c0_13 = arith.constant 0 : index
    %44 = vector.load %arg4[%c0_12, %c0_13] : memref<5x1xf32, #tpu.memory_space<vmem>>, vector<5x1xf32>
    tpu.vector_store %arg4[%c0_12, %c0_13], %43 {strides = array<i32>} : memref<5x1xf32, #tpu.memory_space<vmem>>, vector<5x1xf32>,
    %c0_14 = arith.constant 0 : index
    %c0_15 = arith.constant 0 : index
    %45 = vector.load %arg5[%c0_14, %c0_15] : memref<5x1xf32, #tpu.memory_space<vmem>>, vector<5x1xf32>
    %46 = vector.broadcast %22 : vector<1x128xf32> to vector<5x128xf32>
    %47 = arith.mulf %39, %46 : vector<5x128xf32>
    %cst_16 = arith.constant dense<0.000000e+00> : vector<5xf32>
    %48 = vector.multi_reduction <add>, %47, %cst_16 [1] : vector<5x128xf32> to vector<5xf32>
    %49 = vector.shape_cast %48 : vector<5xf32> to vector<5x1xf32>
    %50 = arith.addf %45, %49 : vector<5x1xf32>
    %c0_17 = arith.constant 0 : index
    %c0_18 = arith.constant 0 : index
    %51 = vector.load %arg5[%c0_17, %c0_18] : memref<5x1xf32, #tpu.memory_space<vmem>>, vector<5x1xf32>
    tpu.vector_store %arg5[%c0_17, %c0_18], %50 {strides = array<i32>} : memref<5x1xf32, #tpu.memory_space<vmem>>, vector<5x1xf32>,
    %c0_19 = arith.constant 0 : index
    %c0_20 = arith.constant 0 : index
    %52 = vector.load %arg6[%c0_19, %c0_20] : memref<5x1xf32, #tpu.memory_space<vmem>>, vector<5x1xf32>
    %53 = vector.broadcast %12 : vector<1x128xf32> to vector<5x128xf32>
    %54 = arith.mulf %39, %53 : vector<5x128xf32>
    %cst_21 = arith.constant dense<0.000000e+00> : vector<5xf32>
    %55 = vector.multi_reduction <add>, %54, %cst_21 [1] : vector<5x128xf32> to vector<5xf32>
    %56 = vector.shape_cast %55 : vector<5xf32> to vector<5x1xf32>
    %57 = arith.addf %52, %56 : vector<5x1xf32>
    %c0_22 = arith.constant 0 : index
    %c0_23 = arith.constant 0 : index
    %58 = vector.load %arg6[%c0_22, %c0_23] : memref<5x1xf32, #tpu.memory_space<vmem>>, vector<5x1xf32>
    tpu.vector_store %arg6[%c0_22, %c0_23], %57 {strides = array<i32>} : memref<5x1xf32, #tpu.memory_space<vmem>>, vector<5x1xf32>,
    %c2_i32 = arith.constant 2 : i32
    %59 = arith.cmpi eq, %arg0, %c2_i32 : i32
    %60 = arith.extui %59 : i1 to i32
    %c0_i32_24 = arith.constant 0 : i32
    %61 = arith.cmpi ne, %60, %c0_i32_24 : i32
    scf.if %61 {
      %c0_25 = arith.constant 0 : index
      %c0_26 = arith.constant 0 : index
      %62 = vector.load %arg4[%c0_25, %c0_26] : memref<5x1xf32, #tpu.memory_space<vmem>>, vector<5x1xf32>
      %c0_27 = arith.constant 0 : index
      %c0_28 = arith.constant 0 : index
      %63 = vector.load %arg6[%c0_27, %c0_28] : memref<5x1xf32, #tpu.memory_space<vmem>>, vector<5x1xf32>
      %c0_29 = arith.constant 0 : index
      %c0_30 = arith.constant 0 : index
      %64 = vector.load %arg5[%c0_29, %c0_30] : memref<5x1xf32, #tpu.memory_space<vmem>>, vector<5x1xf32>
      %65 = arith.subf %63, %64 : vector<5x1xf32>
      %66 = math.absf %65 : vector<5x1xf32>
      %cst_31 = arith.constant 0.000000e+00 : f32
      %67 = vector.broadcast %cst_31 : f32 to vector<5x1xf32>
      %68 = arith.cmpf ogt, %62, %67 : vector<5x1xf32>
      %cst_32 = arith.constant 0.000000e+00 : f32
      %69 = vector.broadcast %cst_32 : f32 to vector<5x1xf32>
      %70 = arith.select %68, %66, %69 : vector<5x1xi1>, vector<5x1xf32>
      %71 = vector.shape_cast %70 : vector<5x1xf32> to vector<1x5x1xf32>
      %cst_33 = arith.constant dense<0.000000e+00> : vector<1xf32>
      %72 = vector.multi_reduction <add>, %71, %cst_33 [1, 2] : vector<1x5x1xf32> to vector<1xf32>
      %73 = vector.shape_cast %72 : vector<1xf32> to vector<1x1x1xf32>
      %74 = vector.extract %73[0, 0, 0] : f32 from vector<1x1x1xf32>
      %75 = vector.broadcast %74 : f32 to vector<1x1xf32>
      %cst_34 = arith.constant 0.00260416674 : f32
      %76 = vector.broadcast %cst_34 : f32 to vector<1x1xf32>
      %77 = arith.mulf %75, %76 : vector<1x1xf32>
      %c0_35 = arith.constant 0 : index
      %c0_36 = arith.constant 0 : index
      %78 = vector.load %arg3[%c0_35, %c0_36] : memref<1x1xf32, #tpu.memory_space<vmem>>, vector<1x1xf32>
      tpu.vector_store %arg3[%c0_35, %c0_36], %77 {strides = array<i32>} : memref<1x1xf32, #tpu.memory_space<vmem>>, vector<1x1xf32>,
    } else {
    }
    return
  }
  func.func @transform_0(%arg0: i32) -> (i32, i32) {
    %c0_i32 = arith.constant 0 : i32
    %c0_i32_0 = arith.constant 0 : i32
    return %c0_i32, %arg0 : i32, i32
  }
  func.func @transform_1(%arg0: i32) -> (i32, i32) {
    %c0_i32 = arith.constant 0 : i32
    %c0_i32_0 = arith.constant 0 : i32
    return %c0_i32, %arg0 : i32, i32
  }
  func.func @transform_2(%arg0: i32) -> (i32, i32) {
    %c0_i32 = arith.constant 0 : i32
    %c0_i32_0 = arith.constant 0 : i32
    %c0_i32_1 = arith.constant 0 : i32
    return %c0_i32, %c0_i32_0 : i32, i32
  }
}

</mosaic_0001>

<llo_original>
// kernel: tpu_custom_call.1
$region0: #{tpu_custom_call.1}
  #allocation0 [shape = 'u32[]', space=smem, size = 0x4, offset = 0x4, fixed_abs, tag = 'smem constant byte address 0x4 - core index']
  #allocation1 [shape = 'u32[144,128]{1,0:T(1,128)}', space=vmem, size = 0x12000, scoped, tag = 'internal scratch']
  #allocation2 [shape = 'f32[5,1]{1,0:T(8,128)}', space=vmem, size = 0x1000, scoped, tag = 'scratch operand']
  #allocation3 [shape = 'f32[5,1]{1,0:T(8,128)}', space=vmem, size = 0x1000, scoped, tag = 'scratch operand']
  #allocation4 [shape = 'f32[5,1]{1,0:T(8,128)}', space=vmem, size = 0x1000, scoped, tag = 'scratch operand']
  %s0 = inlined_call_operand.hbm [shape: f32[10,384], index: 0, kind: input, shape index: {}]
  %s1 = inlined_call_operand.hbm [shape: s32[1,384], index: 1, kind: input, shape index: {}]
  %s2 = inlined_call_operand.hbm [shape: f32[1,1], index: 2, kind: output, shape index: {}]
  %s3 = sld [smem:[#allocation0]]
  $region57: #{tpu_custom_call.1} parent=0
    _
  %s5 = ssub.s32 1, %s3
  %s6 = scalar_select 0, %s5, %s3
  $region1: #{tpu_custom_call.1} parent=0
    #allocation5 [shape = 'u8[16384]{0}', space=vmem, size = 0x4000, scoped, tag = 'input window, operand 0']
    #allocation6 [shape = 's32[2]{0}', space=sflag, size = 0x8, scoped, tag = 'scoped memory for tpu_custom_call.1']
    #allocation7 [shape = 's32[2]{0}', space=sflag, size = 0x8, scoped, tag = 'scoped memory for tpu_custom_call.1']
    #allocation8 [shape = 'u8[1024]{0}', space=vmem, size = 0x400, scoped, tag = 'input window, operand 1']
    #allocation9 [shape = 's32[2]{0}', space=sflag, size = 0x8, scoped, tag = 'scoped memory for tpu_custom_call.1']
    #allocation10 [shape = 'u8[512]{0}', space=vmem, size = 0x400, scoped, tag = 'output window, operand 0, single buffered']
    %7 = vsyncpa [#allocation6], 0
    %s8 = scalar_lea.sflag [#allocation6], 1
    %9 = vsyncpa %s8, 0
    %10 = vsyncpa [#allocation9], 0
    %s11 = scalar_lea.sflag [#allocation9], 1
    %12 = vsyncpa %s11, 0
    %13 = vsyncpa [#allocation7], 0
    loop: start=0, step=1, limit=5
    $region2: #{tpu_custom_call.1} parent=1 // loop_pre_header
      _
    $region3: #{tpu_custom_call.1} parent=1 // loop_header
      %s15 = sphi 0, %s19
      %p16 = scmp.ge.s32.totalorder %s15, 5
      %s25 = sphi 0, %s27
      %s28 = sphi 0, %s25
      %s29 = sphi 0, %s28
      %s45 = sphi 0, %s29
      %s51 = sphi 0, %s53
      %s54 = sphi 0, %s51
      %s55 = sphi 0, %s54
      %s71 = sphi 0, %s55
      %s75 = sphi 0, %s75
      %s77 = sphi 0, %s75
      %s78 = sphi 0, %s77
      %s92 = sphi 0, %s78
    $region4: #{tpu_custom_call.1} parent=1 // loop_header_branch
      %18 = sbr.rel (%p16) target = $region8
    $region5: #{tpu_custom_call.1} parent=1 // loop_body
      %s20 = ssub.s32 %s15, 1
      %s21 = ssub.s32 %s15, 2
      %s22 = sadd.s32 %s15, 1
      %s23 = ssub.s32 %s15, %s22
      %p24 = scmp.eq.s32.totalorder %s23, 0
      %s26 = sadd.s32 %s25, 1
      %s27 = scalar_select %p24, %s25, %s26
      %p30 = pneg %p24
      %p31 = scmp.eq.s32.totalorder %s15, 2
      %p32 = por %p30, %p31
      %p33 = scmp.ne.s32.totalorder %s25, %s28
      %p34 = scmp.eq.s32.totalorder %s15, 0
      %p35 = por %p33, %p34
      %p36 = scmp.ne.s32.totalorder %s25, %s28
      %p37 = scmp.eq.s32.totalorder %s20, 2
      %p38 = por %p36, %p37
      %p39 = scmp.ne.s32.totalorder %s28, %s29
      %p40 = scmp.eq.s32.totalorder %s20, 0
      %p41 = por %p39, %p40
      %p42 = scmp.ne.s32.totalorder %s28, %s29
      %p43 = scmp.eq.s32.totalorder %s21, 2
      %p44 = por %p42, %p43
      %p46 = scmp.ne.s32.totalorder %s29, %s45
      %p47 = scmp.eq.s32.totalorder %s21, 0
      %p48 = por %p46, %p47
      %s49 = ssub.s32 %s15, %s22
      %p50 = scmp.eq.s32.totalorder %s49, 0
      %s52 = sadd.s32 %s51, 1
      %s53 = scalar_select %p50, %s51, %s52
      %p56 = pneg %p50
      %p57 = scmp.eq.s32.totalorder %s15, 2
      %p58 = por %p56, %p57
      %p59 = scmp.ne.s32.totalorder %s51, %s54
      %p60 = scmp.eq.s32.totalorder %s15, 0
      %p61 = por %p59, %p60
      %p62 = scmp.ne.s32.totalorder %s51, %s54
      %p63 = scmp.eq.s32.totalorder %s20, 2
      %p64 = por %p62, %p63
      %p65 = scmp.ne.s32.totalorder %s54, %s55
      %p66 = scmp.eq.s32.totalorder %s20, 0
      %p67 = por %p65, %p66
      %p68 = scmp.ne.s32.totalorder %s54, %s55
      %p69 = scmp.eq.s32.totalorder %s21, 2
      %p70 = por %p68, %p69
      %p72 = scmp.ne.s32.totalorder %s55, %s71
      %p73 = scmp.eq.s32.totalorder %s21, 0
      %p74 = por %p72, %p73
      %s76 = sadd.s32 %s75, 1
      %p79 = scmp.eq.s32.totalorder %s15, 2
      %p80 = scmp.ne.s32.totalorder %s75, %s77
      %p81 = scmp.eq.s32.totalorder %s15, 0
      %p82 = por %p80, %p81
      %p83 = scmp.ne.s32.totalorder %s75, %s77
      %p84 = scmp.eq.s32.totalorder %s20, 2
      %p85 = por %p83, %p84
      %p86 = scmp.ne.s32.totalorder %s77, %s78
      %p87 = scmp.eq.s32.totalorder %s20, 0
      %p88 = por %p86, %p87
      %p89 = scmp.ne.s32.totalorder %s77, %s78
      %p90 = scmp.eq.s32.totalorder %s21, 2
      %p91 = por %p89, %p90
      %p93 = scmp.ne.s32.totalorder %s78, %s92
      %p94 = scmp.eq.s32.totalorder %s21, 0
      %p95 = por %p93, %p94
      %p96 = scmp.le.s32.totalorder 1, %s15
      %p97 = scmp.lt.s32.totalorder %s15, 4
      %p98 = pnand %p96, %p97
      %p99 = pneg %p98
      // Predicated region
      $region9: #{tpu_custom_call.1} parent=5 // pred_check
        _
      $region10: #{tpu_custom_call.1} parent=5 // pred_check_branch
        %101 = sbr.rel (%p98) target = $region12
      $region11: #{tpu_custom_call.1} parent=5 // pred_region
        %s102 = ssub.s32 %s15, 1
      $region12: #{tpu_custom_call.1} parent=5 // pred_fallthru
        _
      %p103 = scmp.lt.s32.totalorder %s15, 3
      // Predicated region
      $region13: #{tpu_custom_call.1} parent=5 // pred_check
        %p104 = pneg %p103
      $region14: #{tpu_custom_call.1} parent=5 // pred_check_branch
        %106 = sbr.rel (%p104) target = $region16
      $region15: #{tpu_custom_call.1} parent=5 // pred_region
        // Predicated region
        $region17: #{tpu_custom_call.1} parent=15 // pred_check
          %p107 = pneg %p35
        $region18: #{tpu_custom_call.1} parent=15 // pred_check_branch
          %109 = sbr.rel (%p107) target = $region20
        $region19: #{tpu_custom_call.1} parent=15 // pred_region
          %s110 = sand.u32 %s25, 1
          %s111 = scalar_lea.sflag [#allocation6], %s110
          %s112 = sand.u32 %s25, 1
          %s113 = smul.addr %s112, 16
          %s114 = scalar_lea.vmem [#allocation5], %s113
          %s116 = ssub.s32 256, 256
          %117 = vsyncadd %s111, %s116
          %s118 = smul.addr %s15, 128
          %s119 = scalar_lea.hbm %s0, %s118
          %s120 = sshll.u32 %s114, 4
          %s121 = int_to_ptr.vmem [resolvable:$true] %s120
          %126 = dma.hbm_to_vmem [thread:$0]  %s119, 256, %s121, %s111, 384, 128, 8
        $region20: #{tpu_custom_call.1} parent=15 // pred_fallthru
          _
        // Predicated region
        $region21: #{tpu_custom_call.1} parent=15 // pred_check
          %p127 = pneg %p61
        $region22: #{tpu_custom_call.1} parent=15 // pred_check_branch
          %129 = sbr.rel (%p127) target = $region24
        $region23: #{tpu_custom_call.1} parent=15 // pred_region
          %s130 = sand.u32 %s51, 1
          %s131 = scalar_lea.sflag [#allocation9], %s130
          %s132 = sand.u32 %s51, 1
          %s133 = scalar_lea.vmem [#allocation8], %s132
          %s135 = ssub.s32 16, 16
          %136 = vsyncadd %s131, %s135
          %s137 = smul.addr %s15, 16
          %s138 = scalar_lea.hbm %s1, %s137
          %s140 = sshll.u32 %s133, 4
          %s141 = int_to_ptr.vmem [resolvable:$true] %s140
          %143 = dma.hbm_to_vmem [thread:$0]  %s138, 16, %s141, %s131
        $region24: #{tpu_custom_call.1} parent=15 // pred_fallthru
          _
      $region16: #{tpu_custom_call.1} parent=5 // pred_fallthru
        _
      %p144 = scmp.le.s32.totalorder 1, %s15
      %p145 = scmp.lt.s32.totalorder %s15, 4
      %p146 = pnand %p144, %p145
      %p147 = pneg %p146
      // Predicated region
      $region25: #{tpu_custom_call.1} parent=5 // pred_check
        _
      $region26: #{tpu_custom_call.1} parent=5 // pred_check_branch
        %149 = sbr.rel (%p146) target = $region28
      $region27: #{tpu_custom_call.1} parent=5 // pred_region
        %s150 = ssub.s32 %s15, 1
        %s151 = sand.u32 %s28, 1
        %s152 = scalar_lea.sflag [#allocation6], %s151
        %s153 = sand.u32 %s28, 1
        %s154 = smul.addr %s153, 16
        %s155 = scalar_lea.vmem [#allocation5], %s154
        // Predicated region
        $region29: #{tpu_custom_call.1} parent=27 // pred_check
          %p156 = pneg %p41
        $region30: #{tpu_custom_call.1} parent=27 // pred_check_branch
          %158 = sbr.rel (%p156) target = $region32
        $region31: #{tpu_custom_call.1} parent=27 // pred_region
          %159 = dma.done %s152, 256
        $region32: #{tpu_custom_call.1} parent=27 // pred_fallthru
          _
        %s160 = sand.u32 %s54, 1
        %s161 = scalar_lea.sflag [#allocation9], %s160
        %s162 = sand.u32 %s54, 1
        %s163 = scalar_lea.vmem [#allocation8], %s162
        // Predicated region
        $region33: #{tpu_custom_call.1} parent=27 // pred_check
          %p164 = pneg %p67
        $region34: #{tpu_custom_call.1} parent=27 // pred_check_branch
          %166 = sbr.rel (%p164) target = $region36
        $region35: #{tpu_custom_call.1} parent=27 // pred_region
          %167 = dma.done %s161, 16
        $region36: #{tpu_custom_call.1} parent=27 // pred_fallthru
          _
        %s168 = sand.u32 %s28, 1
        %s169 = scalar_lea.sflag [#allocation6], %s168
        %s170 = sand.u32 %s28, 1
        %s171 = smul.addr %s170, 16
        %s172 = scalar_lea.vmem [#allocation5], %s171
        %p173 = pneg %p41
        %p174 = pneg %p38
        %s175 = sand.u32 %s54, 1
        %s176 = scalar_lea.sflag [#allocation9], %s175
        %s177 = sand.u32 %s54, 1
        %s178 = scalar_lea.vmem [#allocation8], %s177
        %p179 = pneg %p67
        %p180 = pneg %p64
        %p181 = pneg %p88
        %p182 = pneg %p85
        %p183 = scmp.eq.s32.totalorder %s20, 0
        // Predicated region
        $region37: #{tpu_custom_call.1} parent=27 // pred_check
          %p184 = pneg %p183
        $region38: #{tpu_custom_call.1} parent=27 // pred_check_branch
          %186 = sbr.rel (%p184) target = $region40
        $region39: #{tpu_custom_call.1} parent=27 // pred_region
          %vm187 = vcmask 4096
          %188 = vst.msk [vmem:[#allocation2] sm:$0x1f] %vm187, 0.0
          %189 = vst.msk [vmem:[#allocation3] sm:$0x1f] %vm187, 0.0
          %190 = vst.msk [vmem:[#allocation4] sm:$0x1f] %vm187, 0.0
        $region40: #{tpu_custom_call.1} parent=27 // pred_fallthru
          _
        %v191 = vld [vmem:[%s155] sm:$0xff]
        %v192 = vld [vmem:[%s155 + $0x8] sm:$0x3]
        %v193 = vld [vmem:[%s163] sm:$0x1]
        %vm194 = vcmask 1041408
        %v195 = vsel %vm194, %v192, -inf
        %v196 = vmax.f32 %v191, %v195
        %v197 = vrot.slane %v196, 4
        %v198 = vmax.f32 %v196, %v197
        %v199 = vrot.slane %v198, 2
        %v200 = vmax.f32 %v198, %v199
        %v201 = vrot.slane %v200, 1
        %v202 = vmax.f32 %v200, %v201
        %v203 = vsub.f32 %v191, %v202
        %v204 = vsub.f32 %v192, %v202
        %v205 = vmul.f32 %v203, 1.442695
        %v206 = vpow.pop %v205
        %v207 = vmul.f32 %v204, 1.442695
        %v208 = vpow.pop %v207
        %v209 = vsel %vm194, %v208, 0.0
        %v210 = vadd.f32 %v206, %v209
        %v211 = vrot.slane %v210, 4
        %v212 = vadd.f32 %v210, %v211
        %v213 = vrot.slane %v212, 2
        %v214 = vadd.f32 %v212, %v213
        %v215 = vrot.slane %v214, 1
        %v216 = vadd.f32 %v214, %v215
        %v217 = vrcp.pop %v216
        %v218 = vlaneseq
        %v219 = vshrl.u32 %v218, 7
        %v220 = vadd.s32 %v219, 8
        %vm221 = vcmp.eq.f32.partialorder %v191, %v202
        %vm222 = vcmp.eq.f32.partialorder %v192, %v202
        %v223 = vsel %vm221, %v219, 10
        %v224 = vsel %vm222, %v220, 10
        %v225 = vsel %vm194, %v224, 2147483647
        %vm226 = vcmp.lt.s32.totalorder %v223, %v225
        %v227 = vsel %vm226, %v223, %v225
        %v228 = vrot.slane %v227, 4
        %vm229 = vcmp.lt.s32.totalorder %v227, %v228
        %v230 = vsel %vm229, %v227, %v228
        %v231 = vrot.slane %v230, 2
        %vm232 = vcmp.lt.s32.totalorder %v230, %v231
        %v233 = vsel %vm232, %v230, %v231
        %v234 = vrot.slane %v233, 1
        %vm235 = vcmp.lt.s32.totalorder %v233, %v234
        %v236 = vsel %vm235, %v233, %v234
        %vm237 = vcmp.eq.s32.totalorder %v236, %v193
        %v238 = vsel %vm237, 1, 0
        %v239 = vcvt.s32.f32 %v238
        %v240 = vcvt.s32.f32 %v219
        %v241 = vmul.f32 %v240, 0.1
        %v242 = vadd.f32 %v241, 0.5
        %v243 = vadd.f32 %v242, 0.1
        %vm244 = vcmp.gt.f32.partialorder %v217, %v242
        %vm245 = vcmp.le.f32.partialorder %v217, %v243
        %vm246 = vmand %vm244, %vm245
        %v247 = vsel %vm246, 1, 0
        %v248 = vcvt.s32.f32 %v247
        %v249 = vld [vmem:[#allocation2] sm:$0x1f]
        %vm250 = vcmask 1044480
        %v251 = vsel %vm250, %v248, 0.0
        %252 = vadd.xlane.f32.xlu0 %v251
        %v253 = vpop.xlane.xlu0 %252
        %v254 = vadd.f32 %v249, %v253
        %vm255 = vcmask 4096
        %256 = vst.msk [vmem:[#allocation2] sm:$0x1f] %vm255, %v254
        %v257 = vld [vmem:[#allocation3] sm:$0x1f]
        %v258 = vlaneseq
        %v259 = vshrl.u32 %v258, 7
        %v260 = vsub.s32 0, %v259
        %v261 = vrot.slane %v239, %v260
        %v262 = vmul.f32 %v248, %v261
        %v263 = vsel %vm250, %v262, 0.0
        %264 = vadd.xlane.f32.xlu0 %v263
        %v265 = vpop.xlane.xlu0 %264
        %v266 = vadd.f32 %v257, %v265
        %267 = vst.msk [vmem:[#allocation3] sm:$0x1f] %vm255, %v266
        %v268 = vld [vmem:[#allocation4] sm:$0x1f]
        %v269 = vmul.f32 %v248, %v217
        %v270 = vsel %vm250, %v269, 0.0
        %271 = vadd.xlane.f32.xlu0 %v270
        %v272 = vpop.xlane.xlu0 %271
        %v273 = vadd.f32 %v268, %v272
        %274 = vst.msk [vmem:[#allocation4] sm:$0x1f] %vm255, %v273
        %p275 = scmp.eq.s32.totalorder %s20, 2
        // Predicated region
        $region41: #{tpu_custom_call.1} parent=27 // pred_check
          %p276 = pneg %p275
        $region42: #{tpu_custom_call.1} parent=27 // pred_check_branch
          %278 = sbr.rel (%p276) target = $region44
        $region43: #{tpu_custom_call.1} parent=27 // pred_region
          %v279 = vld [vmem:[#allocation2] sm:$0x1f]
          %v280 = vld [vmem:[#allocation4] sm:$0x1f]
          %v281 = vld [vmem:[#allocation3] sm:$0x1f]
          %v282 = vsub.f32 %v280, %v281
          %v283 = vand.u32 2147483647, %v282
          %vm284 = vcmp.gt.f32.partialorder %v279, 0.0
          %v285 = vsel %vm284, %v283, 0.0
          %v286 = vsel %vm255, %v285, 0.0
          %287 = vadd.xlane.f32.xlu0 %v286
          %v288 = vpop.xlane.xlu0 %287
          %v289 = vrot.slane %v288, 4
          %v290 = vadd.f32 %v288, %v289
          %v291 = vrot.slane %v290, 2
          %v292 = vadd.f32 %v290, %v291
          %v293 = vrot.slane %v292, 1
          %v294 = vadd.f32 %v292, %v293
          %s295 = vtos %v294
          %v296 = vstv %s295
          %v297 = vmul.f32 %v296, 0.0026041667
          %vm298 = vcmask 0
          %299 = vst.msk [vmem:[#allocation10] sm:$0x1] %vm298, %v297
        $region44: #{tpu_custom_call.1} parent=27 // pred_fallthru
          _
        // Predicated region
        $region45: #{tpu_custom_call.1} parent=27 // pred_check
          %p300 = pneg %p85
        $region46: #{tpu_custom_call.1} parent=27 // pred_check_branch
          %302 = sbr.rel (%p300) target = $region48
        $region47: #{tpu_custom_call.1} parent=27 // pred_region
          %s304 = ssub.s32 16, 16
          %305 = vsyncadd [#allocation7], %s304
          %s307 = sshll.u32 [#allocation10], 4
          %s308 = int_to_ptr.vmem [resolvable:$true] %s307
          %310 = dma.vmem_to_hbm [thread:$0]  %s308, 16, %s2, [#allocation7]
        $region48: #{tpu_custom_call.1} parent=27 // pred_fallthru
          _
        // Predicated region
        $region49: #{tpu_custom_call.1} parent=27 // pred_check
          %p311 = pneg %p85
        $region50: #{tpu_custom_call.1} parent=27 // pred_check_branch
          %313 = sbr.rel (%p311) target = $region52
        $region51: #{tpu_custom_call.1} parent=27 // pred_region
          %314 = dma.done [#allocation7], 16
        $region52: #{tpu_custom_call.1} parent=27 // pred_fallthru
          _
      $region28: #{tpu_custom_call.1} parent=5 // pred_fallthru
        _
      %p315 = scmp.le.s32.totalorder 2, %s15
      // Predicated region
      $region53: #{tpu_custom_call.1} parent=5 // pred_check
        %p316 = pneg %p315
      $region54: #{tpu_custom_call.1} parent=5 // pred_check_branch
        %318 = sbr.rel (%p316) target = $region56
      $region55: #{tpu_custom_call.1} parent=5 // pred_region
        %s319 = ssub.s32 %s15, 2
      $region56: #{tpu_custom_call.1} parent=5 // pred_fallthru
        _
    $region6: #{tpu_custom_call.1} parent=1 // loop_footer
      %s19 = sadd.s32 1, %s15
    $region7: #{tpu_custom_call.1} parent=1 // loop_footer_branch
      %14 = sbr.rel target = $region3
    $region8: #{tpu_custom_call.1} parent=1 // loop_exit
      _
    %320 = vsyncpa [#allocation6], 1
    %s321 = scalar_lea.sflag [#allocation6], 1
    %322 = vsyncpa %s321, 1
    %323 = vsyncpa [#allocation9], 1
    %s324 = scalar_lea.sflag [#allocation9], 1
    %325 = vsyncpa %s324, 1
    %326 = vsyncpa [#allocation7], 1
    %s327 = scalar_lea.sflag [#allocation7], 1
    %328 = vsyncpa %s327, 1

</llo_original>
